<compile_context>
chip_gen: v5e
topology: v5e:2x2
jax: 0.10.0
libtpu: 0.0.40
codegen_flags: <defaults>
</compile_context>

<pallas_src>
import functools
import math

import jax
import jax.numpy as jnp
from jax.experimental import pallas as pl
from jax.experimental.pallas import tpu as pltpu


_MAX_TILE = 8192


@functools.lru_cache(maxsize=None)
def _tpu_config():
    """(vmem_limit_bytes, tile_budget_bytes, min_grid_steps), generation-aware.

    v5e/v6e have 128 MiB physical VMEM and a single TensorCore -> big budget,
    >=4 grid steps is enough.  v7x has 64 MiB per TC and 2 TCs sharing the
    'parallel' grid axis -> keep the conservative budget and ask for >=8 steps
    so the megacore split stays balanced.  Unknown -> conservative defaults.
    """
    vmem_limit = 32 * 1024 * 1024
    tile_budget = 16 * 1024 * 1024
    min_steps = 8
    try:
        info = pltpu.get_tpu_info()
        cap = getattr(info, "vmem_capacity_bytes", None)
        if cap is not None and cap >= 100 * 1024 * 1024:
            vmem_limit = 96 * 1024 * 1024
            tile_budget = 48 * 1024 * 1024
            min_steps = 4
    except Exception:
        pass
    return vmem_limit, tile_budget, min_steps


def _pick_tile(total, unit_bytes, *, align, budget, min_steps, cap=_MAX_TILE):
    """Largest tile (multiple of `align`) along one axis such that the
    double-buffered in/out tiles plus live f32 temps fit `budget`.  Keeps
    >= `min_steps` grid steps (pipeline ramp / megacore sharding) when the
    axis is large enough to afford it."""
    t = min(cap, max(align, budget // max(unit_bytes, 1)))
    t = max(align, (t // align) * align)
    if t >= total:
        return total                       # single block == full axis (allowed)
    if pl.cdiv(total, t) < min_steps:
        alt = (total // min_steps // align) * align
        if alt >= align:
            t = alt
    return t


# ----------------------------- channels_last --------------------------------
# Plain path: rows on sublanes, C on lanes, lane reduce.  Used for C >= 128
# (or when the grouped layout below does not apply).


def _ln_rows_kernel(x_ref, w_ref, b_ref, o_ref, *, eps):
    # x_ref: (TM, C); w_ref/b_ref: (1, C) float32, resident in VMEM.
    x = x_ref[...].astype(jnp.float32)
    mean = jnp.mean(x, axis=-1, keepdims=True)
    xc = x - mean
    var = jnp.mean(xc * xc, axis=-1, keepdims=True)
    inv = jax.lax.rsqrt(var + eps)
    o_ref[...] = (xc * inv * w_ref[...] + b_ref[...]).astype(o_ref.dtype)


def _ln_last_plain(x2d, weight, bias, eps, *, force_row_tile=None):
    m, c = x2d.shape
    vmem_limit, budget, min_steps = _tpu_config()
    itemsize = x2d.dtype.itemsize
    sublane = max(8, 32 // itemsize)              # 8 (f32) / 16 (bf16) / 32 (i8)
    c_pad = pl.cdiv(c, 128) * 128                 # lane padding inside VMEM
    # in+out tiles double-buffered + ~2 live f32 temps (x, xc):
    unit = c_pad * (2 * 2 * itemsize + 2 * 4)
    tm = force_row_tile if force_row_tile is not None else _pick_tile(
        m, unit, align=sublane, budget=budget, min_steps=min_steps)

    return pl.pallas_call(
        functools.partial(_ln_rows_kernel, eps=eps),
        out_shape=jax.ShapeDtypeStruct((m, c), x2d.dtype),
        grid_spec=pltpu.PrefetchScalarGridSpec(
            num_scalar_prefetch=0,
            grid=(pl.cdiv(m, tm),),               # partial last block: no jnp.pad
            in_specs=[
                pl.BlockSpec((tm, c), lambda i: (i, 0)),
                pl.BlockSpec((1, c), lambda i: (0, 0)),
                pl.BlockSpec((1, c), lambda i: (0, 0)),
            ],
            out_specs=pl.BlockSpec((tm, c), lambda i: (i, 0)),
        ),
        compiler_params=pltpu.CompilerParams(
            dimension_semantics=("parallel",),
            vmem_limit_bytes=vmem_limit,
        ),
    )(
        x2d,
        weight.reshape(1, c).astype(jnp.float32),
        bias.reshape(1, c).astype(jnp.float32),
    )


# Grouped (lane-dense) path for small C: (M, C) -> (M/G, G*C), G = 128//C.
# Per-row reductions become MXU segment-sums against constant 0/1 matrices,
# keeping lanes dense (unmasked vst) and VALU work proportional to real data.


def _ln_rows_grouped_kernel(x_ref, seg_ref, segt_ref, w_ref, b_ref, o_ref, *,
                            c, eps):
    # x_ref: (TM, G*C); seg_ref: (G*C, G); segt_ref: (G, G*C); w/b: (1, G*C).
    hi = jax.lax.Precision.HIGHEST                # keep f32-accurate MXU passes
    x = x_ref[...].astype(jnp.float32)
    seg = seg_ref[...]
    segt = segt_ref[...]
    inv_c = 1.0 / c
    mean_g = jnp.dot(x, seg, preferred_element_type=jnp.float32,
                     precision=hi) * inv_c                      # (TM, G)
    mean = jnp.dot(mean_g, segt, preferred_element_type=jnp.float32,
                   precision=hi)                                # (TM, G*C)
    xc = x - mean
    var_g = jnp.dot(xc * xc, seg, preferred_element_type=jnp.float32,
                    precision=hi) * inv_c                       # (TM, G)
    inv_g = jax.lax.rsqrt(var_g + eps)
    inv = jnp.dot(inv_g, segt, preferred_element_type=jnp.float32,
                  precision=hi)                                 # (TM, G*C)
    o_ref[...] = (xc * inv * w_ref[...] + b_ref[...]).astype(o_ref.dtype)


def _ln_last_grouped(x2d, weight, bias, eps, g, *, force_row_tile=None):
    m, c = x2d.shape
    mg, gc = m // g, g * c                        # gc == 128 by construction
    xg = x2d.reshape(mg, gc)                      # free reshape, lane-dense
    vmem_limit, budget, min_steps = _tpu_config()
    itemsize = x2d.dtype.itemsize
    sublane = max(8, 32 // itemsize)
    unit = gc * (2 * 2 * itemsize + 2 * 4)        # in+out (2x buf) + 2 f32 temps
    tm = force_row_tile if force_row_tile is not None else _pick_tile(
        mg, unit, align=sublane, budget=budget, min_steps=min_steps)

    # Constant 0/1 segment matrix: lane l belongs to group l // c.
    lane = jnp.arange(gc, dtype=jnp.int32)
    seg = (lane[:, None] // c == jnp.arange(g, dtype=jnp.int32)[None, :]
           ).astype(jnp.float32)                  # (gc, g)
    segt = seg.T                                  # (g, gc)
    wg = jnp.tile(weight.astype(jnp.float32).reshape(c), (g,)).reshape(1, gc)
    bg = jnp.tile(bias.astype(jnp.float32).reshape(c), (g,)).reshape(1, gc)

    out = pl.pallas_call(
        functools.partial(_ln_rows_grouped_kernel, c=c, eps=eps),
        out_shape=jax.ShapeDtypeStruct((mg, gc), x2d.dtype),
        grid_spec=pltpu.PrefetchScalarGridSpec(
            num_scalar_prefetch=0,
            grid=(pl.cdiv(mg, tm),),
            in_specs=[
                pl.BlockSpec((tm, gc), lambda i: (i, 0)),
                pl.BlockSpec((gc, g), lambda i: (0, 0)),
                pl.BlockSpec((g, gc), lambda i: (0, 0)),
                pl.BlockSpec((1, gc), lambda i: (0, 0)),
                pl.BlockSpec((1, gc), lambda i: (0, 0)),
            ],
            out_specs=pl.BlockSpec((tm, gc), lambda i: (i, 0)),
        ),
        compiler_params=pltpu.CompilerParams(
            dimension_semantics=("parallel",),
            vmem_limit_bytes=vmem_limit,
        ),
    )(xg, seg, segt, wg, bg)
    return out.reshape(m, c)


def _layer_norm_channels_last(x2d, weight, bias, eps, *, force_row_tile=None):
    m, c = x2d.shape
    g = 128 // c if (c < 128 and 128 % c == 0) else 1
    if g > 1 and m % g == 0:
        return _ln_last_grouped(x2d, weight, bias, eps, g,
                                force_row_tile=force_row_tile)
    return _ln_last_plain(x2d, weight, bias, eps, force_row_tile=force_row_tile)


# ----------------------------- channels_first -------------------------------


def _ln_cfirst_kernel(x_ref, w_ref, b_ref, o_ref, *, eps):
    # x_ref: (TN, C, TS) -- C on sublanes, spatial on lanes (lane-dense).
    # w_ref/b_ref: (1, C, 1) float32.
    x = x_ref[...].astype(jnp.float32)
    mean = jnp.mean(x, axis=1, keepdims=True)     # sublane reduce over C
    xc = x - mean
    var = jnp.mean(xc * xc, axis=1, keepdims=True)
    inv = jax.lax.rsqrt(var + eps)
    o_ref[...] = (xc * inv * w_ref[...] + b_ref[...]).astype(o_ref.dtype)


def _layer_norm_channels_first(x, weight, bias, eps, *, force_tiles=None):
    n, c = x.shape[0], x.shape[1]
    s = math.prod(x.shape[2:]) if x.ndim > 2 else 1
    x3d = x.reshape(n, c, s)                      # free reshape; NO transpose
    vmem_limit, budget, min_steps = _tpu_config()
    itemsize = x.dtype.itemsize
    c_rows = pl.cdiv(c, 8) * 8                    # sublane padding inside VMEM
    s_pad = pl.cdiv(s, 128) * 128                 # lane padding inside VMEM
    per_lane = c_rows * (2 * 2 * itemsize + 2 * 4)  # in+out (2x buf) + f32 temps
    per_batch = per_lane * s_pad

    if force_tiles is not None:
        tn, ts = force_tiles
    elif per_batch <= budget:
        # Whole spatial extent per block; batch several N per grid step so
        # each DMA is large (small-spatial NCHW is otherwise per-step-overhead
        # dominated).
        ts = s
        tn = max(1, min(n, budget // max(per_batch, 1)))
        if n >= min_steps and n // tn < min_steps:
            tn = max(1, n // min_steps)
    else:
        tn = 1
        ts = _pick_tile(s, per_lane, align=128, budget=budget,
                        min_steps=min_steps)

    out = pl.pallas_call(
        functools.partial(_ln_cfirst_kernel, eps=eps),
        out_shape=jax.ShapeDtypeStruct((n, c, s), x.dtype),
        grid_spec=pltpu.PrefetchScalarGridSpec(
            num_scalar_prefetch=0,
            grid=(pl.cdiv(n, tn), pl.cdiv(s, ts)),
            in_specs=[
                pl.BlockSpec((tn, c, ts), lambda i, j: (i, 0, j)),
                pl.BlockSpec((1, c, 1), lambda i, j: (0, 0, 0)),
                pl.BlockSpec((1, c, 1), lambda i, j: (0, 0, 0)),
            ],
            out_specs=pl.BlockSpec((tn, c, ts), lambda i, j: (i, 0, j)),
        ),
        compiler_params=pltpu.CompilerParams(
            dimension_semantics=("parallel", "parallel"),
            vmem_limit_bytes=vmem_limit,
        ),
    )(
        x3d,
        weight.reshape(1, c, 1).astype(jnp.float32),
        bias.reshape(1, c, 1).astype(jnp.float32),
    )
    return out.reshape(x.shape)


# --------------------------------- public -----------------------------------


def layer_norm(x, weight, bias, eps=1e-6, data_format="channels_last"):
    """Matches the PyTorch LayerNorm module's forward pass."""
    if data_format not in ("channels_last", "channels_first"):
        raise NotImplementedError
    if data_format == "channels_last":
        c = x.shape[-1]
        lead = x.shape[:-1]
        y2d = _layer_norm_channels_last(x.reshape(-1, c), weight, bias, eps)
        return y2d.reshape(*lead, c)
    return _layer_norm_channels_first(x, weight, bias, eps)


def _reference(x, weight, bias, eps, data_format):
    # pure-JAX reference mirroring the PyTorch code.
    if data_format == "channels_last":
        u = jnp.mean(x, axis=-1, keepdims=True)
        s = jnp.mean((x - u) ** 2, axis=-1, keepdims=True)
        return (x - u) / jnp.sqrt(s + eps) * weight + bias
    else:
        u = jnp.mean(x, axis=1, keepdims=True)
        s = jnp.mean((x - u) ** 2, axis=1, keepdims=True)
        xn = (x - u) / jnp.sqrt(s + eps)
        wb = weight.reshape((1, -1) + (1,) * (x.ndim - 2))
        bb = bias.reshape((1, -1) + (1,) * (x.ndim - 2))
        return wb * xn + bb


if __name__ == "__main__":
    key = jax.random.PRNGKey(0)
    eps = 1e-6
    k1, k2, k3, k4, k5, k6 = jax.random.split(key, 6)

    # --- channels_first: NCHW input, normalized over C = 4 (batched blocks) --
    c_first = 4
    x_cf = jax.random.normal(k1, (2, c_first, 16, 16), dtype=jnp.float32)
    w_cf = jnp.ones((c_first,), jnp.float32) + 0.1 * jnp.arange(c_first, dtype=jnp.float32)
    b_cf = 0.05 * jnp.arange(c_first, dtype=jnp.float32)
    y_cf = jax.block_until_ready(
        layer_norm(x_cf, w_cf, b_cf, eps=eps, data_format="channels_first"))
    ref_cf = _reference(x_cf, w_cf, b_cf, eps, "channels_first")
    assert jnp.allclose(y_cf, ref_cf, atol=1e-5, rtol=1e-5)

    # --- channels_last: (..., C) input, C = 32, float32 (lane-dense grouped) -
    c_last = 32
    x_cl = jax.random.normal(k2, (2, 8, 8, c_last), dtype=jnp.float32)
    w_cl = jnp.ones((c_last,), jnp.float32) + 0.02 * jnp.arange(c_last, dtype=jnp.float32)
    b_cl = 0.01 * jnp.arange(c_last, dtype=jnp.float32)
    y_cl = jax.block_until_ready(
        layer_norm(x_cl, w_cl, b_cl, eps=eps, data_format="channels_last"))
    ref_cl = _reference(x_cl, w_cl, b_cl, eps, "channels_last")
    assert jnp.allclose(y_cl, ref_cl, atol=1e-5, rtol=1e-5)

    # --- channels_last, bf16 activations: HBM traffic stays bf16, f32 math ---
    x_bf = jax.random.normal(k3, (2, 8, 8, c_last), dtype=jnp.float32).astype(jnp.bfloat16)
    y_bf = jax.block_until_ready(
        layer_norm(x_bf, w_cl, b_cl, eps=eps, data_format="channels_last"))
    ref_bf = _reference(x_bf.astype(jnp.float32), w_cl, b_cl, eps, "channels_last")
    assert y_bf.dtype == jnp.bfloat16
    assert jnp.allclose(y_bf.astype(jnp.float32), ref_bf, atol=5e-2, rtol=5e-2)

    # --- partial last block, grouped path (M % tile != 0, M % G == 0) --------
    x_pg = jax.random.normal(k4, (84, c_last), dtype=jnp.float32)
    y_pg = jax.block_until_ready(
        _layer_norm_channels_last(x_pg, w_cl, b_cl, eps, force_row_tile=8))
    ref_pg = _reference(x_pg, w_cl, b_cl, eps, "channels_last")
    assert jnp.allclose(y_pg, ref_pg, atol=1e-5, rtol=1e-5)

    # --- partial last block, plain fallback path (M % G != 0) ----------------
    x_pp = jax.random.normal(k5, (23, c_last), dtype=jnp.float32)
    y_pp = jax.block_until_ready(
        _layer_norm_channels_last(x_pp, w_cl, b_cl, eps, force_row_tile=8))
    ref_pp = _reference(x_pp, w_cl, b_cl, eps, "channels_last")
    assert jnp.allclose(y_pp, ref_pp, atol=1e-5, rtol=1e-5)

    # --- channels_first with partial N and partial S blocks ------------------
    x_ps = jax.random.normal(k6, (3, c_first, 10, 30), dtype=jnp.float32)
    y_ps = jax.block_until_ready(
        _layer_norm_channels_first(x_ps, w_cf, b_cf, eps, force_tiles=(2, 128)))
    ref_ps = _reference(x_ps, w_cf, b_cf, eps, "channels_first")
    assert jnp.allclose(y_ps, ref_ps, atol=1e-5, rtol=1e-5)

    print("KERNEL_OK")
</pallas_src>

<mosaic_0001>
module attributes {stable_mosaic.version = 11 : i64} {
  func.func @_ln_cfirst_kernel(%arg0: i32, %arg1: i32, %arg2: memref<2x4x256xf32, #tpu.memory_space<vmem>>, %arg3: memref<1x4x1xf32, #tpu.memory_space<vmem>>, %arg4: memref<1x4x1xf32, #tpu.memory_space<vmem>>, %arg5: memref<2x4x256xf32, #tpu.memory_space<vmem>>) attributes {dimension_semantics = [#tpu.dimension_semantics<parallel>, #tpu.dimension_semantics<parallel>], iteration_bounds = array<i64: 1, 1>, scalar_prefetch = 0 : i64, scratch_operands = 0 : i64, tpu.core_type = #tpu.core_type<tc>, window_params = [{transform_indices = @transform_0, window_bounds = array<i64: 2, 4, 256>}, {pipeline_mode = #tpu.pipeline_mode<synchronous>, transform_indices = @transform_1, window_bounds = array<i64: 1, 4, 1>}, {pipeline_mode = #tpu.pipeline_mode<synchronous>, transform_indices = @transform_2, window_bounds = array<i64: 1, 4, 1>}, {transform_indices = @transform_3, window_bounds = array<i64: 2, 4, 256>}]} {
    %c0 = arith.constant 0 : index
    %c0_0 = arith.constant 0 : index
    %c0_1 = arith.constant 0 : index
    %0 = vector.load %arg2[%c0, %c0_0, %c0_1] : memref<2x4x256xf32, #tpu.memory_space<vmem>>, vector<2x4x256xf32>
    %cst = arith.constant dense<0.000000e+00> : vector<2x256xf32>
    %1 = vector.multi_reduction <add>, %0, %cst [1] : vector<2x4x256xf32> to vector<2x256xf32>
    %2 = vector.shape_cast %1 : vector<2x256xf32> to vector<2x1x256xf32>
    %cst_2 = arith.constant 4.000000e+00 : f32
    %3 = vector.broadcast %cst_2 : f32 to vector<2x1x256xf32>
    %4 = arith.divf %2, %3 : vector<2x1x256xf32>
    %5 = vector.broadcast %4 : vector<2x1x256xf32> to vector<2x4x256xf32>
    %6 = arith.subf %0, %5 : vector<2x4x256xf32>
    %7 = arith.mulf %6, %6 : vector<2x4x256xf32>
    %cst_3 = arith.constant dense<0.000000e+00> : vector<2x256xf32>
    %8 = vector.multi_reduction <add>, %7, %cst_3 [1] : vector<2x4x256xf32> to vector<2x256xf32>
    %9 = vector.shape_cast %8 : vector<2x256xf32> to vector<2x1x256xf32>
    %cst_4 = arith.constant 4.000000e+00 : f32
    %10 = vector.broadcast %cst_4 : f32 to vector<2x1x256xf32>
    %11 = arith.divf %9, %10 : vector<2x1x256xf32>
    %cst_5 = arith.constant 9.99999997E-7 : f32
    %12 = vector.broadcast %cst_5 : f32 to vector<2x1x256xf32>
    %13 = arith.addf %11, %12 : vector<2x1x256xf32>
    %14 = math.rsqrt %13 : vector<2x1x256xf32>
    %15 = vector.broadcast %14 : vector<2x1x256xf32> to vector<2x4x256xf32>
    %16 = arith.mulf %6, %15 : vector<2x4x256xf32>
    %c0_6 = arith.constant 0 : index
    %c0_7 = arith.constant 0 : index
    %c0_8 = arith.constant 0 : index
    %17 = vector.load %arg3[%c0_6, %c0_7, %c0_8] : memref<1x4x1xf32, #tpu.memory_space<vmem>>, vector<1x4x1xf32>
    %18 = vector.broadcast %17 : vector<1x4x1xf32> to vector<2x4x256xf32>
    %19 = arith.mulf %16, %18 : vector<2x4x256xf32>
    %c0_9 = arith.constant 0 : index
    %c0_10 = arith.constant 0 : index
    %c0_11 = arith.constant 0 : index
    %20 = vector.load %arg4[%c0_9, %c0_10, %c0_11] : memref<1x4x1xf32, #tpu.memory_space<vmem>>, vector<1x4x1xf32>
    %21 = vector.broadcast %20 : vector<1x4x1xf32> to vector<2x4x256xf32>
    %22 = arith.addf %19, %21 : vector<2x4x256xf32>
    %c0_12 = arith.constant 0 : index
    %c0_13 = arith.constant 0 : index
    %c0_14 = arith.constant 0 : index
    %23 = vector.load %arg5[%c0_12, %c0_13, %c0_14] : memref<2x4x256xf32, #tpu.memory_space<vmem>>, vector<2x4x256xf32>
    tpu.vector_store %arg5[%c0_12, %c0_13, %c0_14], %22 {strides = array<i32>} : memref<2x4x256xf32, #tpu.memory_space<vmem>>, vector<2x4x256xf32>,
    return
  }
  func.func @transform_0(%arg0: i32, %arg1: i32) -> (i32, i32, i32) {
    %c0_i32 = arith.constant 0 : i32
    %c0_i32_0 = arith.constant 0 : i32
    return %arg0, %c0_i32, %arg1 : i32, i32, i32
  }
  func.func @transform_1(%arg0: i32, %arg1: i32) -> (i32, i32, i32) {
    %c0_i32 = arith.constant 0 : i32
    %c0_i32_0 = arith.constant 0 : i32
    %c0_i32_1 = arith.constant 0 : i32
    %c0_i32_2 = arith.constant 0 : i32
    return %c0_i32, %c0_i32_0, %c0_i32_1 : i32, i32, i32
  }
  func.func @transform_2(%arg0: i32, %arg1: i32) -> (i32, i32, i32) {
    %c0_i32 = arith.constant 0 : i32
    %c0_i32_0 = arith.constant 0 : i32
    %c0_i32_1 = arith.constant 0 : i32
    %c0_i32_2 = arith.constant 0 : i32
    return %c0_i32, %c0_i32_0, %c0_i32_1 : i32, i32, i32
  }
  func.func @transform_3(%arg0: i32, %arg1: i32) -> (i32, i32, i32) {
    %c0_i32 = arith.constant 0 : i32
    %c0_i32_0 = arith.constant 0 : i32
    return %arg0, %c0_i32, %arg1 : i32, i32, i32
  }
}

</mosaic_0001>

<llo_original>
// kernel: tpu_custom_call.1
$region0: #{tpu_custom_call.1}
  #allocation0 [shape = 'u32[]', space=smem, size = 0x4, offset = 0x4, fixed_abs, tag = 'smem constant byte address 0x4 - core index']
  #allocation1 [shape = 'u32[72,128]{1,0:T(1,128)}', space=vmem, size = 0x9000, scoped, tag = 'internal scratch']
  %s0 = inlined_call_operand.hbm [shape: f32[2,4,256], index: 0, kind: input, shape index: {}]
  %s1 = inlined_call_operand.vmem [shape: f32[1,4,1], index: 1, kind: input, shape index: {}]
  %s2 = inlined_call_operand.vmem [shape: f32[1,4,1], index: 2, kind: input, shape index: {}]
  %s3 = inlined_call_operand.hbm [shape: f32[2,4,256], index: 3, kind: output, shape index: {}]
  %s4 = sld [smem:[#allocation0]]
  $region26: #{tpu_custom_call.1} parent=0
    _
  %s6 = ssub.s32 1, %s4
  %s7 = scalar_select 0, %s6, %s4
  $region1: #{tpu_custom_call.1} parent=0
    #allocation2 [shape = 'u8[8192]{0}', space=vmem, size = 0x2000, scoped, tag = 'input window, operand 0, single buffered']
    #allocation3 [shape = 's32[1]{0}', space=sflag, size = 0x4, scoped, tag = 'scoped memory for tpu_custom_call.1']
    #allocation4 [shape = 's32[1]{0}', space=sflag, size = 0x4, scoped, tag = 'scoped memory for tpu_custom_call.1']
    #allocation5 [shape = 'u8[8192]{0}', space=vmem, size = 0x2000, scoped, tag = 'output window, operand 0, single buffered']
    %8 = vsyncpa [#allocation3], 0
    %9 = vsyncpa [#allocation4], 0
    // Predicated region
    $region2: #{tpu_custom_call.1} parent=1 // pred_check
      _
    $region3: #{tpu_custom_call.1} parent=1 // pred_check_branch
      %11 = sbr.rel (0) target = $region5
    $region4: #{tpu_custom_call.1} parent=1 // pred_region
      %13 = vsyncadd [#allocation3], 0
      %s14 = sshll.u32 %s0, 4
      %s15 = int_to_ptr.hbm [resolvable:$true] %s14
      %s16 = sshll.u32 [#allocation2], 4
      %s17 = int_to_ptr.vmem [resolvable:$true] %s16
      %22 = dma.hbm_to_vmem [thread:$0]  %s15, 256, %s17, [#allocation3], 128, 128, 8
    $region5: #{tpu_custom_call.1} parent=1 // pred_fallthru
      _
    // Predicated region
    $region6: #{tpu_custom_call.1} parent=1 // pred_check
      _
    $region7: #{tpu_custom_call.1} parent=1 // pred_check_branch
      %24 = sbr.rel (0) target = $region9
    $region8: #{tpu_custom_call.1} parent=1 // pred_region
      _
    $region9: #{tpu_custom_call.1} parent=1 // pred_fallthru
      _
    // Predicated region
    $region10: #{tpu_custom_call.1} parent=1 // pred_check
      _
    $region11: #{tpu_custom_call.1} parent=1 // pred_check_branch
      %26 = sbr.rel (0) target = $region13
    $region12: #{tpu_custom_call.1} parent=1 // pred_region
      _
    $region13: #{tpu_custom_call.1} parent=1 // pred_fallthru
      _
    // Predicated region
    $region14: #{tpu_custom_call.1} parent=1 // pred_check
      _
    $region15: #{tpu_custom_call.1} parent=1 // pred_check_branch
      %28 = sbr.rel (0) target = $region17
    $region16: #{tpu_custom_call.1} parent=1 // pred_region
      %30 = dma.done [#allocation3], 256
    $region17: #{tpu_custom_call.1} parent=1 // pred_fallthru
      _
    %v31 = vld [vmem:[#allocation2] sm:$0xff]
    %v32 = vld [vmem:[#allocation2 + $0x8] sm:$0xff]
    %35 = vst [vmem:[#allocation1] ss:$2 sm:$0xff] %v31
    %v36 = vld.sshfl [vmem:[#allocation1] sm:$0xff pattern:$0x75316420]
    %v37 = vld.sshfl [vmem:[#allocation1 + $0x8] sm:$0xff pattern:$0x75316420]
    %s38 = scalar_lea.vmem [#allocation1], 16
    %39 = vst [vmem:[%s38] ss:$2 sm:$0xff] %v32
    %v40 = vld.sshfl [vmem:[#allocation1 + $0x10] sm:$0xff pattern:$0x75316420]
    %v41 = vld.sshfl [vmem:[#allocation1 + $0x18] sm:$0xff pattern:$0x75316420]
    %vm46 = vcmask 1043456
    %v47 = vsel %vm46, %v36, 0.0
    %v48 = vrot.slane %v47, 4
    %v49 = vadd.f32 %v47, %v48
    %v50 = vrot.slane %v49, 2
    %v51 = vadd.f32 %v49, %v50
    %v52 = vrot.slane %v51, 1
    %v53 = vadd.f32 %v51, %v52
    %v54 = vsel %vm46, %v37, 0.0
    %v55 = vrot.slane %v54, 4
    %v56 = vadd.f32 %v54, %v55
    %v57 = vrot.slane %v56, 2
    %v58 = vadd.f32 %v56, %v57
    %v59 = vrot.slane %v58, 1
    %v60 = vadd.f32 %v58, %v59
    %v61 = vsel %vm46, %v40, 0.0
    %v62 = vrot.slane %v61, 4
    %v63 = vadd.f32 %v61, %v62
    %v64 = vrot.slane %v63, 2
    %v65 = vadd.f32 %v63, %v64
    %v66 = vrot.slane %v65, 1
    %v67 = vadd.f32 %v65, %v66
    %v68 = vsel %vm46, %v41, 0.0
    %v69 = vrot.slane %v68, 4
    %v70 = vadd.f32 %v68, %v69
    %v71 = vrot.slane %v70, 2
    %v72 = vadd.f32 %v70, %v71
    %v73 = vrot.slane %v72, 1
    %v74 = vadd.f32 %v72, %v73
    %v75 = vrcp.pop 4.0
    %v76 = vmul.f32 4.0, %v75
    %v77 = vsub.f32 1.0, %v76
    %v78 = vmul.f32 %v75, %v77
    %v79 = vadd.f32 %v75, %v78
    %vm80 = vweird.f32 %v75
    %v81 = vsel %vm80, %v75, %v79
    %v82 = vmul.f32 %v53, %v81
    %v83 = vmul.f32 %v60, %v81
    %v84 = vmul.f32 %v67, %v81
    %v85 = vmul.f32 %v74, %v81
    %v90 = vrot.slane %v83, 4
    %v91 = vrot.slane %v85, 4
    %v92 = vsel %vm46, %v82, %v90
    %v93 = vsel %vm46, %v84, %v91
    %v96 = vsub.f32 %v31, %v92
    %v97 = vsub.f32 %v32, %v93
    %v98 = vmul.f32 %v96, %v96
    %v99 = vmul.f32 %v97, %v97
    %102 = vst [vmem:[#allocation1] ss:$2 sm:$0xff] %v98
    %v103 = vld.sshfl [vmem:[#allocation1] sm:$0xff pattern:$0x75316420]
    %v104 = vld.sshfl [vmem:[#allocation1 + $0x8] sm:$0xff pattern:$0x75316420]
    %s105 = scalar_lea.vmem [#allocation1], 16
    %106 = vst [vmem:[%s105] ss:$2 sm:$0xff] %v99
    %v107 = vld.sshfl [vmem:[#allocation1 + $0x10] sm:$0xff pattern:$0x75316420]
    %v108 = vld.sshfl [vmem:[#allocation1 + $0x18] sm:$0xff pattern:$0x75316420]
    %v113 = vsel %vm46, %v103, 0.0
    %v114 = vrot.slane %v113, 4
    %v115 = vadd.f32 %v113, %v114
    %v116 = vrot.slane %v115, 2
    %v117 = vadd.f32 %v115, %v116
    %v118 = vrot.slane %v117, 1
    %v119 = vadd.f32 %v117, %v118
    %v120 = vsel %vm46, %v104, 0.0
    %v121 = vrot.slane %v120, 4
    %v122 = vadd.f32 %v120, %v121
    %v123 = vrot.slane %v122, 2
    %v124 = vadd.f32 %v122, %v123
    %v125 = vrot.slane %v124, 1
    %v126 = vadd.f32 %v124, %v125
    %v127 = vsel %vm46, %v107, 0.0
    %v128 = vrot.slane %v127, 4
    %v129 = vadd.f32 %v127, %v128
    %v130 = vrot.slane %v129, 2
    %v131 = vadd.f32 %v129, %v130
    %v132 = vrot.slane %v131, 1
    %v133 = vadd.f32 %v131, %v132
    %v134 = vsel %vm46, %v108, 0.0
    %v135 = vrot.slane %v134, 4
    %v136 = vadd.f32 %v134, %v135
    %v137 = vrot.slane %v136, 2
    %v138 = vadd.f32 %v136, %v137
    %v139 = vrot.slane %v138, 1
    %v140 = vadd.f32 %v138, %v139
    %v141 = vmul.f32 %v119, %v81
    %v142 = vmul.f32 %v126, %v81
    %v143 = vmul.f32 %v133, %v81
    %v144 = vmul.f32 %v140, %v81
    %v145 = vadd.f32 %v141, 1e-06
    %v146 = vadd.f32 %v142, 1e-06
    %v147 = vadd.f32 %v143, 1e-06
    %v148 = vadd.f32 %v144, 1e-06
    %v149 = vrsqrt.pop %v145
    %v150 = vmul.f32 %v149, %v145
    %v151 = vmul.f32 %v150, %v149
    %v152 = vmul.f32 0.5, %v151
    %v153 = vsub.f32 1.5, %v152
    %v154 = vmul.f32 %v149, %v153
    %vm155 = vweird.f32 %v145
    %vm156 = vweird.f32 %v149
    %vm157 = vmor %vm155, %vm156
    %v158 = vsel %vm157, %v149, %v154
    %v159 = vrsqrt.pop %v146
    %v160 = vmul.f32 %v159, %v146
    %v161 = vmul.f32 %v160, %v159
    %v162 = vmul.f32 0.5, %v161
    %v163 = vsub.f32 1.5, %v162
    %v164 = vmul.f32 %v159, %v163
    %vm165 = vweird.f32 %v146
    %vm166 = vweird.f32 %v159
    %vm167 = vmor %vm165, %vm166
    %v168 = vsel %vm167, %v159, %v164
    %v169 = vrsqrt.pop %v147
    %v170 = vmul.f32 %v169, %v147
    %v171 = vmul.f32 %v170, %v169
    %v172 = vmul.f32 0.5, %v171
    %v173 = vsub.f32 1.5, %v172
    %v174 = vmul.f32 %v169, %v173
    %vm175 = vweird.f32 %v147
    %vm176 = vweird.f32 %v169
    %vm177 = vmor %vm175, %vm176
    %v178 = vsel %vm177, %v169, %v174
    %v179 = vrsqrt.pop %v148
    %v180 = vmul.f32 %v179, %v148
    %v181 = vmul.f32 %v180, %v179
    %v182 = vmul.f32 0.5, %v181
    %v183 = vsub.f32 1.5, %v182
    %v184 = vmul.f32 %v179, %v183
    %vm185 = vweird.f32 %v148
    %vm186 = vweird.f32 %v179
    %vm187 = vmor %vm185, %vm186
    %v188 = vsel %vm187, %v179, %v184
    %v193 = vrot.slane %v168, 4
    %v194 = vrot.slane %v188, 4
    %v195 = vsel %vm46, %v158, %v193
    %v196 = vsel %vm46, %v178, %v194
    %v199 = vmul.f32 %v96, %v195
    %v200 = vmul.f32 %v97, %v196
    %v201 = vld [vmem:[%s1] sm:$0xf]
    %203 = vset.pattern.permute.xlu0 0
    %204 = vperm.xlu0 %203, %v201
    %v205 = vpop.permute.xlu0 %204
    %v207 = vunpack.c.l.s4 839922192
    %v208 = vunpack.c.0.s8 %v207
    %v209 = vperm.slane %v205, %v208
    %v211 = vmul.f32 %v199, %v209
    %v212 = vmul.f32 %v200, %v209
    %v213 = vld [vmem:[%s2] sm:$0xf]
    %215 = vset.pattern.permute.xlu0 0
    %216 = vperm.xlu0 %215, %v213
    %v217 = vpop.permute.xlu0 %216
    %v219 = vunpack.c.l.s4 839922192
    %v220 = vunpack.c.0.s8 %v219
    %v221 = vperm.slane %v217, %v220
    %v223 = vadd.f32 %v211, %v221
    %v224 = vadd.f32 %v212, %v221
    %225 = vst [vmem:[#allocation5] sm:$0xff] %v223
    %226 = vst [vmem:[#allocation5 + $0x8] sm:$0xff] %v224
    // Predicated region
    $region18: #{tpu_custom_call.1} parent=1 // pred_check
      _
    $region19: #{tpu_custom_call.1} parent=1 // pred_check_branch
      %228 = sbr.rel (0) target = $region21
    $region20: #{tpu_custom_call.1} parent=1 // pred_region
      %230 = vsyncadd [#allocation4], 0
      %s231 = sshll.u32 [#allocation5], 4
      %s232 = int_to_ptr.vmem [resolvable:$true] %s231
      %s233 = sshll.u32 %s3, 4
      %s234 = int_to_ptr.hbm [resolvable:$true] %s233
      %239 = dma.vmem_to_hbm [thread:$0]  %s232, 256, %s234, [#allocation4], 128, 128, 8
    $region21: #{tpu_custom_call.1} parent=1 // pred_fallthru
      _
    // Predicated region
    $region22: #{tpu_custom_call.1} parent=1 // pred_check
      _
    $region23: #{tpu_custom_call.1} parent=1 // pred_check_branch
      %241 = sbr.rel (0) target = $region25
    $region24: #{tpu_custom_call.1} parent=1 // pred_region
      %243 = dma.done [#allocation4], 256
    $region25: #{tpu_custom_call.1} parent=1 // pred_fallthru
      _
    %244 = vsyncpa [#allocation3], 1
    %245 = vsyncpa [#allocation4], 1

</llo_original>
